<compile_context>
chip_gen: v7x
topology: tpu7x:2x2x1
jax: 0.10.0
libtpu: 0.0.40
codegen_flags: <defaults>
</compile_context>

<pallas_src>
import functools
import math

import jax
import jax.numpy as jnp
from jax.experimental import pallas as pl
from jax.experimental.pallas import tpu as pltpu


def _choose_tile(hw, num_classes, itemsize,
                 block_budget_bytes=8 << 20, max_tile=8192):
    """Pick the pixel-tile (lane) size for the (1, C, TILE_P) block."""
    cap = block_budget_bytes // max(num_classes * itemsize, 1)
    cap = max(128, min(max_tile, (cap // 128) * 128))
    if hw <= cap:
        # One block spans the whole pixel axis of a sample; a block dim equal
        # to the full array dim is always legal (no 128-divisibility needed).
        return hw
    return cap  # multiple of 128; ragged tail is masked in-kernel


def _make_accuracy_kernel(topk, thresh, hw, tile):
    """Kernel over blocks pred:(1,C,TILE_P), tgt:(1,1,TILE_P)."""
    n_k = len(topk)

    def kernel(pred_ref, tgt_ref, out_ref, *acc_refs):
        pid_n = pl.program_id(0)
        pid_p = pl.program_id(1)
        is_first = jnp.logical_and(pid_n == 0, pid_p == 0)
        is_last = jnp.logical_and(pid_n == pl.num_programs(0) - 1,
                                  pid_p == pl.num_programs(1) - 1)

        @pl.when(is_first)
        def _():
            for a in acc_refs:
                a[...] = jnp.zeros_like(a)
            for i in range(n_k):
                out_ref[i] = jnp.int32(0)

        scores = pred_ref[0].astype(jnp.float32)          # (C, TILE_P)
        tgt = tgt_ref[0]                                   # (1, TILE_P) int32
        c = scores.shape[0]

        cls_ids = jax.lax.broadcasted_iota(jnp.int32, (c, tile), 0)

        # Score of the target class for every pixel (class-axis reduce).
        is_tgt = cls_ids == tgt                            # broadcast (C,TILE_P)
        tgt_score = jnp.sum(jnp.where(is_tgt, scores, 0.0),
                            axis=0, keepdims=True)         # (1, TILE_P)

        # Rank of the target class under descending sort with
        # lowest-index-wins tie breaking (matches lax.top_k / torch.topk):
        #   rank = #(score > s_t) + #(score == s_t and class < target)
        greater = jnp.sum((scores > tgt_score).astype(jnp.int32),
                          axis=0, keepdims=True)
        ties_lo = jnp.sum(jnp.logical_and(scores == tgt_score,
                                          cls_ids < tgt).astype(jnp.int32),
                          axis=0, keepdims=True)
        rank = greater + ties_lo                           # (1, TILE_P)

        # Mask the ragged tail of the pixel axis (no wrapper-side padding).
        lane = jax.lax.broadcasted_iota(jnp.int32, (1, tile), 1)
        valid = (pid_p * tile + lane) < hw
        if thresh is not None:
            valid = jnp.logical_and(valid, tgt_score > jnp.float32(thresh))

        # Lane-dense int32 accumulation; one vadd per k per step.
        for i, k in enumerate(topk):
            hit = jnp.logical_and(rank < k, valid)
            acc_refs[i][...] = acc_refs[i][...] + hit.astype(jnp.int32)

        # Single cross-lane reduce + SMEM store, once, on the final step.
        @pl.when(is_last)
        def _():
            for i in range(n_k):
                out_ref[i] = jnp.sum(acc_refs[i][...])

    return kernel


@functools.partial(jax.jit, static_argnames=("topk", "thresh", "tile"))
def accuracy_pallas(pred, target, topk=(1,), thresh=None, tile=None):
    """Top-k accuracy matching mmseg `accuracy(pred, target, topk, thresh)`.

    pred:   (N, C, ...) float logits (e.g. NCHW), any float dtype.
    target: (N, ...) integer labels.
    Returns a list of float32 scalars, one per k in `topk`.
    """
    topk = (topk,) if isinstance(topk, int) else tuple(topk)
    assert pred.ndim == target.ndim + 1
    n, c = pred.shape[0], pred.shape[1]
    assert max(topk) <= c

    hw = math.prod(pred.shape[2:]) if pred.ndim > 2 else 1
    numel = n * hw

    # Metadata-only reshapes: keep the native class-major layout in HBM.
    pred3 = pred.reshape(n, c, hw)
    tgt3 = target.reshape(n, 1, hw).astype(jnp.int32)

    if tile is None:
        tile = _choose_tile(hw, c, jnp.dtype(pred.dtype).itemsize)
    num_p = pl.cdiv(hw, tile)
    grid = (n, num_p)

    kernel = _make_accuracy_kernel(topk, thresh, hw, tile)
    n_k = len(topk)

    counts = pl.pallas_call(
        kernel,
        out_shape=jax.ShapeDtypeStruct((n_k,), jnp.int32),
        grid_spec=pltpu.PrefetchScalarGridSpec(
            num_scalar_prefetch=0,
            grid=grid,
            in_specs=[
                pl.BlockSpec((1, c, tile), lambda i, j: (i, 0, j)),
                pl.BlockSpec((1, 1, tile), lambda i, j: (i, 0, j)),
            ],
            out_specs=pl.BlockSpec(memory_space=pltpu.SMEM),
            scratch_shapes=[pltpu.VMEM((1, tile), jnp.int32)
                            for _ in range(n_k)],
        ),
        compiler_params=pltpu.CompilerParams(
            # Output / scratch accumulate across both grid axes.
            dimension_semantics=("arbitrary", "arbitrary"),
            # Raise scoped VMEM (v5e default is 16 MiB); 2x8 MiB pred buffers
            # + target + scratch stay well under this on every generation.
            vmem_limit_bytes=32 * 1024 * 1024,
        ),
    )(pred3, tgt3)

    scale = jnp.float32(100.0 / numel)
    return [counts[i].astype(jnp.float32) * scale for i in range(n_k)]


class Accuracy:
    """JAX/Pallas counterpart of the PyTorch `Accuracy` nn.Module."""

    def __init__(self, topk=(1,), thresh=None):
        self.topk = topk if isinstance(topk, tuple) else (topk,)
        self.thresh = thresh

    def __call__(self, pred, target):
        return accuracy_pallas(pred, target, topk=self.topk, thresh=self.thresh)


def _accuracy_ref(pred, target, topk=(1,), thresh=None):
    """Pure-JAX reference (mirrors mmseg accuracy)."""
    c = pred.shape[1]
    pred2 = jnp.moveaxis(pred, 1, -1).reshape(-1, c)
    tgt = target.reshape(-1)
    maxk = max(topk)
    vals, idxs = jax.lax.top_k(pred2, maxk)
    correct = idxs == tgt[:, None]
    if thresh is not None:
        correct = correct & (vals > thresh)
    out = []
    for k in topk:
        out.append(jnp.sum(correct[:, :k].astype(jnp.float32))
                   * (100.0 / tgt.size))
    return out


if __name__ == "__main__":
    key = jax.random.PRNGKey(0)
    k1, k2 = jax.random.split(key)

    N, C, H, W = 2, 4, 16, 16          # NCHW logits, like the PyTorch module
    pred = jax.random.normal(k1, (N, C, H, W), dtype=jnp.float32)
    target = jax.random.randint(k2, (N, H, W), 0, C, dtype=jnp.int32)

    # Module defaults: topk=(1,), thresh=None
    module = Accuracy(topk=(1,), thresh=None)
    res = module(pred, target)
    res = [jax.block_until_ready(r) for r in res]
    ref = _accuracy_ref(pred, target, topk=(1,), thresh=None)
    for got, want in zip(res, ref):
        assert abs(float(got) - float(want)) < 1e-3, (float(got), float(want))

    # Exercise the multi-k + threshold path as well.
    module2 = Accuracy(topk=(1, 3), thresh=0.3)
    res2 = [jax.block_until_ready(r) for r in module2(pred, target)]
    ref2 = _accuracy_ref(pred, target, topk=(1, 3), thresh=0.3)
    for got, want in zip(res2, ref2):
        assert abs(float(got) - float(want)) < 1e-3, (float(got), float(want))

    print("KERNEL_OK")
</pallas_src>

<mosaic_0001>
module attributes {stable_mosaic.version = 11 : i64} {
  func.func @kernel(%arg0: i32, %arg1: i32, %arg2: memref<1x4x256xf32, #tpu.memory_space<vmem>>, %arg3: memref<1x1x256xi32, #tpu.memory_space<vmem>>, %arg4: memref<1xi32, #tpu.memory_space<smem>>, %arg5: memref<1x256xi32, #tpu.memory_space<vmem>>) attributes {dimension_semantics = [#tpu.dimension_semantics<arbitrary>, #tpu.dimension_semantics<arbitrary>], iteration_bounds = array<i64: 2, 1>, scalar_prefetch = 0 : i64, scratch_operands = 1 : i64, tpu.core_type = #tpu.core_type<tc>, window_params = [{transform_indices = @transform_0, window_bounds = array<i64: 1, 4, 256>}, {transform_indices = @transform_1, window_bounds = array<i64: 1, 1, 256>}, {transform_indices = @transform_2, window_bounds = array<i64: 1>}]} {
    %c0_i32 = arith.constant 0 : i32
    %0 = arith.cmpi eq, %arg0, %c0_i32 : i32
    %c0_i32_0 = arith.constant 0 : i32
    %1 = arith.cmpi eq, %arg1, %c0_i32_0 : i32
    %2 = arith.andi %0, %1 : i1
    %c1_i32 = arith.constant 1 : i32
    %3 = arith.cmpi eq, %arg0, %c1_i32 : i32
    %c0_i32_1 = arith.constant 0 : i32
    %4 = arith.cmpi eq, %arg1, %c0_i32_1 : i32
    %5 = arith.andi %3, %4 : i1
    %6 = arith.extui %2 : i1 to i32
    %c0_i32_2 = arith.constant 0 : i32
    %7 = arith.cmpi ne, %6, %c0_i32_2 : i32
    scf.if %7 {
      %c0_i32_18 = arith.constant 0 : i32
      %48 = vector.broadcast %c0_i32_18 : i32 to vector<1x256xi32>
      %c0_19 = arith.constant 0 : index
      %c0_20 = arith.constant 0 : index
      %49 = vector.load %arg5[%c0_19, %c0_20] : memref<1x256xi32, #tpu.memory_space<vmem>>, vector<1x256xi32>
      tpu.vector_store %arg5[%c0_19, %c0_20], %48 {strides = array<i32>} : memref<1x256xi32, #tpu.memory_space<vmem>>, vector<1x256xi32>,
      %c0_i32_21 = arith.constant 0 : i32
      %c0_22 = arith.constant 0 : index
      %50 = memref.load %arg4[%c0_22] : memref<1xi32, #tpu.memory_space<smem>>
      memref.store %c0_i32_21, %arg4[%c0_22] : memref<1xi32, #tpu.memory_space<smem>>
    } else {
    }
    %c0 = arith.constant 0 : index
    %c0_3 = arith.constant 0 : index
    %c0_4 = arith.constant 0 : index
    %8 = vector.load %arg2[%c0, %c0_3, %c0_4] : memref<1x4x256xf32, #tpu.memory_space<vmem>>, vector<1x4x256xf32>
    %9 = vector.shape_cast %8 : vector<1x4x256xf32> to vector<4x256xf32>
    %c0_5 = arith.constant 0 : index
    %c0_6 = arith.constant 0 : index
    %c0_7 = arith.constant 0 : index
    %10 = vector.load %arg3[%c0_5, %c0_6, %c0_7] : memref<1x1x256xi32, #tpu.memory_space<vmem>>, vector<1x1x256xi32>
    %11 = vector.shape_cast %10 : vector<1x1x256xi32> to vector<1x256xi32>
    %12 = tpu.iota {dimensions = array<i32: 0>} : vector<4x256xi32>
    %13 = vector.broadcast %11 : vector<1x256xi32> to vector<4x256xi32>
    %14 = arith.cmpi eq, %12, %13 : vector<4x256xi32>
    %cst = arith.constant 0.000000e+00 : f32
    %15 = vector.broadcast %cst : f32 to vector<4x256xf32>
    %16 = arith.select %14, %9, %15 : vector<4x256xi1>, vector<4x256xf32>
    %cst_8 = arith.constant dense<0.000000e+00> : vector<256xf32>
    %17 = vector.multi_reduction <add>, %16, %cst_8 [0] : vector<4x256xf32> to vector<256xf32>
    %18 = vector.shape_cast %17 : vector<256xf32> to vector<1x256xf32>
    %19 = vector.broadcast %18 : vector<1x256xf32> to vector<4x256xf32>
    %20 = arith.cmpf ogt, %9, %19 : vector<4x256xf32>
    %21 = arith.extui %20 : vector<4x256xi1> to vector<4x256xi32>
    %cst_9 = arith.constant dense<0> : vector<256xi32>
    %22 = vector.multi_reduction <add>, %21, %cst_9 [0] : vector<4x256xi32> to vector<256xi32>
    %23 = vector.shape_cast %22 : vector<256xi32> to vector<1x256xi32>
    %24 = vector.broadcast %18 : vector<1x256xf32> to vector<4x256xf32>
    %25 = arith.cmpf oeq, %9, %24 : vector<4x256xf32>
    %26 = vector.broadcast %11 : vector<1x256xi32> to vector<4x256xi32>
    %27 = arith.cmpi slt, %12, %26 : vector<4x256xi32>
    %28 = arith.andi %25, %27 : vector<4x256xi1>
    %29 = arith.extui %28 : vector<4x256xi1> to vector<4x256xi32>
    %cst_10 = arith.constant dense<0> : vector<256xi32>
    %30 = vector.multi_reduction <add>, %29, %cst_10 [0] : vector<4x256xi32> to vector<256xi32>
    %31 = vector.shape_cast %30 : vector<256xi32> to vector<1x256xi32>
    %32 = arith.addi %23, %31 : vector<1x256xi32>
    %33 = tpu.iota {dimensions = array<i32: 1>} : vector<1x256xi32>
    %c256_i32 = arith.constant 256 : i32
    %34 = arith.muli %arg1, %c256_i32 : i32
    %35 = vector.broadcast %34 : i32 to vector<1x256xi32>
    %36 = arith.addi %35, %33 : vector<1x256xi32>
    %c256_i32_11 = arith.constant 256 : i32
    %37 = vector.broadcast %c256_i32_11 : i32 to vector<1x256xi32>
    %38 = arith.cmpi slt, %36, %37 : vector<1x256xi32>
    %c1_i32_12 = arith.constant 1 : i32
    %39 = vector.broadcast %c1_i32_12 : i32 to vector<1x256xi32>
    %40 = arith.cmpi slt, %32, %39 : vector<1x256xi32>
    %41 = arith.andi %40, %38 : vector<1x256xi1>
    %c0_13 = arith.constant 0 : index
    %c0_14 = arith.constant 0 : index
    %42 = vector.load %arg5[%c0_13, %c0_14] : memref<1x256xi32, #tpu.memory_space<vmem>>, vector<1x256xi32>
    %43 = arith.extui %41 : vector<1x256xi1> to vector<1x256xi32>
    %44 = arith.addi %42, %43 : vector<1x256xi32>
    %c0_15 = arith.constant 0 : index
    %c0_16 = arith.constant 0 : index
    %45 = vector.load %arg5[%c0_15, %c0_16] : memref<1x256xi32, #tpu.memory_space<vmem>>, vector<1x256xi32>
    tpu.vector_store %arg5[%c0_15, %c0_16], %44 {strides = array<i32>} : memref<1x256xi32, #tpu.memory_space<vmem>>, vector<1x256xi32>,
    %46 = arith.extui %5 : i1 to i32
    %c0_i32_17 = arith.constant 0 : i32
    %47 = arith.cmpi ne, %46, %c0_i32_17 : i32
    scf.if %47 {
      %c0_18 = arith.constant 0 : index
      %c0_19 = arith.constant 0 : index
      %48 = vector.load %arg5[%c0_18, %c0_19] : memref<1x256xi32, #tpu.memory_space<vmem>>, vector<1x256xi32>
      %49 = vector.shape_cast %48 : vector<1x256xi32> to vector<1x1x256xi32>
      %cst_20 = arith.constant dense<0> : vector<1xi32>
      %50 = vector.multi_reduction <add>, %49, %cst_20 [1, 2] : vector<1x1x256xi32> to vector<1xi32>
      %51 = vector.shape_cast %50 : vector<1xi32> to vector<1x1x1xi32>
      %52 = vector.extract %51[0, 0, 0] : i32 from vector<1x1x1xi32>
      %c0_21 = arith.constant 0 : index
      %53 = memref.load %arg4[%c0_21] : memref<1xi32, #tpu.memory_space<smem>>
      memref.store %52, %arg4[%c0_21] : memref<1xi32, #tpu.memory_space<smem>>
    } else {
    }
    return
  }
  func.func @transform_0(%arg0: i32, %arg1: i32) -> (i32, i32, i32) {
    %c0_i32 = arith.constant 0 : i32
    %c0_i32_0 = arith.constant 0 : i32
    return %arg0, %c0_i32, %arg1 : i32, i32, i32
  }
  func.func @transform_1(%arg0: i32, %arg1: i32) -> (i32, i32, i32) {
    %c0_i32 = arith.constant 0 : i32
    %c0_i32_0 = arith.constant 0 : i32
    return %arg0, %c0_i32, %arg1 : i32, i32, i32
  }
  func.func @transform_2(%arg0: i32, %arg1: i32) -> i32 {
    %c0_i32 = arith.constant 0 : i32
    %c0_i32_0 = arith.constant 0 : i32
    return %c0_i32 : i32
  }
}

</mosaic_0001>

<llo_original>
// kernel: accuracy_pallas.1
$region0: #{accuracy_pallas.1}
  #allocation0 [shape = 'u32[]', space=smem, size = 0x4, offset = 0x4, fixed_abs, tag = 'smem constant byte address 0x4 - core index']
  #allocation1 [shape = 'u32[144,128]{1,0:T(1,128)}', space=vmem, size = 0x12000, scoped, tag = 'internal scratch']
  #allocation2 [shape = 's32[1,256]{1,0:T(1,128)}', space=vmem, size = 0x400, scoped, tag = 'scratch operand']
  %s0 = inlined_call_operand.vmem [shape: f32[2,4,256], index: 0, kind: input, shape index: {}]
  %s1 = inlined_call_operand.vmem [shape: s32[2,1,256], index: 1, kind: input, shape index: {}]
  %s2 = inlined_call_operand.hbm [shape: s32[1], index: 2, kind: output, shape index: {}]
  %s3 = sld [smem:[#allocation0]]
  $region49: #{accuracy_pallas.1} parent=0
    _
  %s5 = ssub.s32 1, %s3
  %s6 = scalar_select 0, %s5, %s3
  $region1: #{accuracy_pallas.1} parent=0
    #allocation3 [shape = 'u8[512]{0}', space=smem, size = 0x200, scoped, tag = 'output window, operand 0, single buffered']
    #allocation4 [shape = 's32[2]{0}', space=sflag, size = 0x8, scoped, tag = 'scoped memory for accuracy_pallas.1']
    %7 = vsyncpa [#allocation4], 0
    loop: start=0, step=1, limit=4
    $region2: #{accuracy_pallas.1} parent=1 // loop_pre_header
      _
    $region3: #{accuracy_pallas.1} parent=1 // loop_header
      %s9 = sphi 0, %s13
      %p10 = scmp.ge.s32.totalorder %s9, 4
      %s16 = sphi 0, %s28
      %s17 = sphi 0, %s24
      %s18 = sphi 0, %s16
      %s19 = sphi 0, %s17
      %s20 = sphi 0, %s18
      %s21 = sphi 0, %s19
      %s33 = sphi 0, %s35
      %s36 = sphi 0, %s33
      %s37 = sphi 0, %s36
      %s53 = sphi 0, %s37
      %s61 = sphi 0, %s63
      %s64 = sphi 0, %s61
      %s65 = sphi 0, %s64
      %s81 = sphi 0, %s65
      %s85 = sphi 0, %s85
      %s87 = sphi 0, %s85
      %s88 = sphi 0, %s87
      %s102 = sphi 0, %s88
    $region4: #{accuracy_pallas.1} parent=1 // loop_header_branch
      %12 = sbr.rel (%p10) target = $region8
    $region5: #{accuracy_pallas.1} parent=1 // loop_body
      %s14 = ssub.s32 %s9, 1
      %s15 = ssub.s32 %s9, 2
      %s22 = sadd.s32 1, %s17
      %p23 = scmp.ge.s32.totalorder %s22, 1
      %s24 = scalar_select %p23, 0, %s22
      %s25 = sadd.s32 1, %s16
      %s26 = scalar_select %p23, %s25, %s16
      %p27 = scmp.ge.s32.totalorder %s26, 2
      %s28 = scalar_select %p27, 0, %s26
      %s29 = ssub.s32 %s16, %s28
      %s30 = ssub.s32 %s17, %s24
      %s31 = sor.u32 %s29, %s30
      %p32 = scmp.eq.s32.totalorder %s31, 0
      %s34 = sadd.s32 %s33, 1
      %s35 = scalar_select %p32, %s33, %s34
      %p38 = pneg %p32
      %p39 = scmp.eq.s32.totalorder %s9, 1
      %p40 = por %p38, %p39
      %p41 = scmp.ne.s32.totalorder %s33, %s36
      %p42 = scmp.eq.s32.totalorder %s9, 0
      %p43 = por %p41, %p42
      %p44 = scmp.ne.s32.totalorder %s33, %s36
      %p45 = scmp.eq.s32.totalorder %s14, 1
      %p46 = por %p44, %p45
      %p47 = scmp.ne.s32.totalorder %s36, %s37
      %p48 = scmp.eq.s32.totalorder %s14, 0
      %p49 = por %p47, %p48
      %p50 = scmp.ne.s32.totalorder %s36, %s37
      %p51 = scmp.eq.s32.totalorder %s15, 1
      %p52 = por %p50, %p51
      %p54 = scmp.ne.s32.totalorder %s37, %s53
      %p55 = scmp.eq.s32.totalorder %s15, 0
      %p56 = por %p54, %p55
      %s57 = ssub.s32 %s16, %s28
      %s58 = ssub.s32 %s17, %s24
      %s59 = sor.u32 %s57, %s58
      %p60 = scmp.eq.s32.totalorder %s59, 0
      %s62 = sadd.s32 %s61, 1
      %s63 = scalar_select %p60, %s61, %s62
      %p66 = pneg %p60
      %p67 = scmp.eq.s32.totalorder %s9, 1
      %p68 = por %p66, %p67
      %p69 = scmp.ne.s32.totalorder %s61, %s64
      %p70 = scmp.eq.s32.totalorder %s9, 0
      %p71 = por %p69, %p70
      %p72 = scmp.ne.s32.totalorder %s61, %s64
      %p73 = scmp.eq.s32.totalorder %s14, 1
      %p74 = por %p72, %p73
      %p75 = scmp.ne.s32.totalorder %s64, %s65
      %p76 = scmp.eq.s32.totalorder %s14, 0
      %p77 = por %p75, %p76
      %p78 = scmp.ne.s32.totalorder %s64, %s65
      %p79 = scmp.eq.s32.totalorder %s15, 1
      %p80 = por %p78, %p79
      %p82 = scmp.ne.s32.totalorder %s65, %s81
      %p83 = scmp.eq.s32.totalorder %s15, 0
      %p84 = por %p82, %p83
      %s86 = sadd.s32 %s85, 1
      %p89 = scmp.eq.s32.totalorder %s9, 1
      %p90 = scmp.ne.s32.totalorder %s85, %s87
      %p91 = scmp.eq.s32.totalorder %s9, 0
      %p92 = por %p90, %p91
      %p93 = scmp.ne.s32.totalorder %s85, %s87
      %p94 = scmp.eq.s32.totalorder %s14, 1
      %p95 = por %p93, %p94
      %p96 = scmp.ne.s32.totalorder %s87, %s88
      %p97 = scmp.eq.s32.totalorder %s14, 0
      %p98 = por %p96, %p97
      %p99 = scmp.ne.s32.totalorder %s87, %s88
      %p100 = scmp.eq.s32.totalorder %s15, 1
      %p101 = por %p99, %p100
      %p103 = scmp.ne.s32.totalorder %s88, %s102
      %p104 = scmp.eq.s32.totalorder %s15, 0
      %p105 = por %p103, %p104
      %p106 = scmp.le.s32.totalorder 1, %s9
      %p107 = scmp.lt.s32.totalorder %s9, 3
      %p108 = pnand %p106, %p107
      %p109 = pneg %p108
      // Predicated region
      $region9: #{accuracy_pallas.1} parent=5 // pred_check
        _
      $region10: #{accuracy_pallas.1} parent=5 // pred_check_branch
        %111 = sbr.rel (%p108) target = $region12
      $region11: #{accuracy_pallas.1} parent=5 // pred_region
        %s112 = ssub.s32 %s9, 1
      $region12: #{accuracy_pallas.1} parent=5 // pred_fallthru
        _
      %p113 = scmp.lt.s32.totalorder %s9, 2
      // Predicated region
      $region13: #{accuracy_pallas.1} parent=5 // pred_check
        %p114 = pneg %p113
      $region14: #{accuracy_pallas.1} parent=5 // pred_check_branch
        %116 = sbr.rel (%p114) target = $region16
      $region15: #{accuracy_pallas.1} parent=5 // pred_region
        // Predicated region
        $region17: #{accuracy_pallas.1} parent=15 // pred_check
          %p117 = pneg %p43
        $region18: #{accuracy_pallas.1} parent=15 // pred_check_branch
          %119 = sbr.rel (%p117) target = $region20
        $region19: #{accuracy_pallas.1} parent=15 // pred_region
          %s120 = smul.u32 2, %s17
          %p121 = scmp.lt.s32.totalorder %s16, 1
          %s122 = scalar_select %p121, %s16, 1
          %p123 = scmp.lt.s32.totalorder %s120, 1
          %s124 = scalar_select %p123, %s120, 1
          %s125 = smul.addr %s122, 2
          %s126 = sadd.s32 %s124, %s125
          %s127 = smul.addr %s126, 4
          %s128 = scalar_lea.vmem %s0, %s127
          %s129 = smul.u32 2, %s17
        $region20: #{accuracy_pallas.1} parent=15 // pred_fallthru
          _
        // Predicated region
        $region21: #{accuracy_pallas.1} parent=15 // pred_check
          %p130 = pneg %p71
        $region22: #{accuracy_pallas.1} parent=15 // pred_check_branch
          %132 = sbr.rel (%p130) target = $region24
        $region23: #{accuracy_pallas.1} parent=15 // pred_region
          %s133 = smul.u32 2, %s17
          %p134 = scmp.lt.s32.totalorder %s16, 1
          %s135 = scalar_select %p134, %s16, 1
          %p136 = scmp.lt.s32.totalorder %s133, 1
          %s137 = scalar_select %p136, %s133, 1
          %s138 = smul.addr %s135, 2
          %s139 = sadd.s32 %s137, %s138
          %s140 = scalar_lea.vmem %s1, %s139
          %s141 = smul.u32 2, %s17
        $region24: #{accuracy_pallas.1} parent=15 // pred_fallthru
          _
      $region16: #{accuracy_pallas.1} parent=5 // pred_fallthru
        _
      %p142 = scmp.le.s32.totalorder 1, %s9
      %p143 = scmp.lt.s32.totalorder %s9, 3
      %p144 = pnand %p142, %p143
      %p145 = pneg %p144
      // Predicated region
      $region25: #{accuracy_pallas.1} parent=5 // pred_check
        _
      $region26: #{accuracy_pallas.1} parent=5 // pred_check_branch
        %147 = sbr.rel (%p144) target = $region28
      $region27: #{accuracy_pallas.1} parent=5 // pred_region
        %s148 = ssub.s32 %s9, 1
        %s149 = smul.u32 2, %s19
        %p150 = scmp.lt.s32.totalorder %s18, 1
        %s151 = scalar_select %p150, %s18, 1
        %p152 = scmp.lt.s32.totalorder %s149, 1
        %s153 = scalar_select %p152, %s149, 1
        %s154 = smul.addr %s151, 2
        %s155 = sadd.s32 %s153, %s154
        %s156 = smul.addr %s155, 4
        %s157 = scalar_lea.vmem %s0, %s156
        %p158 = pneg %p49
        %p159 = pneg %p46
        %s160 = smul.u32 2, %s19
        %p161 = scmp.lt.s32.totalorder %s18, 1
        %s162 = scalar_select %p161, %s18, 1
        %p163 = scmp.lt.s32.totalorder %s160, 1
        %s164 = scalar_select %p163, %s160, 1
        %s165 = smul.addr %s162, 2
        %s166 = sadd.s32 %s164, %s165
        %s167 = scalar_lea.vmem %s1, %s166
        %p168 = pneg %p77
        %p169 = pneg %p74
        %p170 = pneg %p98
        %p171 = pneg %p95
        %s172 = smul.u32 2, %s19
        %p173 = scmp.lt.s32.totalorder %s18, 1
        %s174 = scalar_select %p173, %s18, 1
        %p175 = scmp.lt.s32.totalorder %s172, 1
        %s176 = scalar_select %p175, %s172, 1
        %s177 = smul.addr %s174, 2
        %s178 = sadd.s32 %s176, %s177
        %s179 = smul.addr %s178, 4
        %s180 = scalar_lea.vmem %s0, %s179
        %s181 = smul.u32 2, %s19
        %s182 = smul.u32 2, %s19
        %p183 = scmp.lt.s32.totalorder %s18, 1
        %s184 = scalar_select %p183, %s18, 1
        %p185 = scmp.lt.s32.totalorder %s182, 1
        %s186 = scalar_select %p185, %s182, 1
        %s187 = smul.addr %s184, 2
        %s188 = sadd.s32 %s186, %s187
        %s189 = scalar_lea.vmem %s1, %s188
        %s190 = smul.u32 2, %s19
        %p191 = scmp.eq.s32.totalorder %s18, 0
        %p192 = scmp.eq.s32.totalorder %s19, 0
        %p193 = pnand %p191, %p192
        %p194 = pneg %p193
        %p195 = scmp.eq.s32.totalorder %s18, 1
        %p196 = pnand %p195, %p192
        %p197 = pneg %p196
        // Predicated region
        $region29: #{accuracy_pallas.1} parent=27 // pred_check
          _
        $region30: #{accuracy_pallas.1} parent=27 // pred_check_branch
          %199 = sbr.rel (%p193) target = $region32
        $region31: #{accuracy_pallas.1} parent=27 // pred_region
          %v200 = vlaneseq
          %vm201 = vcmp.ge.s32.totalorder %v200, 0
          %vm202 = vcmp.lt.s32.totalorder %v200, 256
          %vm203 = vmand %vm201, %vm202
          %204 = vst.msk [vmem:[#allocation2] sm:$0x3] %vm203, 0
          %s205 = scalar_lea.smem [#allocation3], 0
          %206 = sst [smem:[%s205]] 0
        $region32: #{accuracy_pallas.1} parent=27 // pred_fallthru
          _
        %v207 = vld [vmem:[%s180] sm:$0xff]
        %v208 = vld [vmem:[%s189] sm:$0x3]
        %v209 = vlaneseq
        %v210 = vshrl.u32 %v209, 7
        %v211 = vlaneseq
        %v212 = vshrl.u32 %v211, 7
        %v213 = vsub.s32 0, %v212
        %v214 = vrot.slane %v208, %v213
        %v215 = vlaneseq
        %v216 = vshrl.u32 %v215, 7
        %v217 = vsub.s32 1, %v216
        %v218 = vrot.slane %v208, %v217
        %vm219 = vcmp.eq.s32.totalorder %v210, %v214
        %vm220 = vcmp.eq.s32.totalorder %v210, %v218
        %v222 = vcombine.high %v207, %v207
        %v224 = vsel %vm219, %v207, 0.0
        %v225 = vsel %vm220, %v222, 0.0
        %vm226 = vcmask 1043456
        %v227 = vsel %vm226, %v224, 0.0
        %v228 = vrot.slane %v227, 4
        %v229 = vadd.f32 %v227, %v228
        %v230 = vrot.slane %v229, 2
        %v231 = vadd.f32 %v229, %v230
        %v232 = vrot.slane %v231, 1
        %v233 = vadd.f32 %v231, %v232
        %v234 = vsel %vm226, %v225, 0.0
        %v235 = vrot.slane %v234, 4
        %v236 = vadd.f32 %v234, %v235
        %v237 = vrot.slane %v236, 2
        %v238 = vadd.f32 %v236, %v237
        %v239 = vrot.slane %v238, 1
        %v240 = vadd.f32 %v238, %v239
        %v243 = vcombine.low %v233, %v240
        %vm245 = vcmp.gt.f32.partialorder %v207, %v243
        %v246 = vsel %vm245, 1, 0
        %v247 = vcombine.high %v246, %v246
        %v248 = vsel %vm226, %v246, 0
        %v249 = vrot.slane %v248, 4
        %v250 = vadd.s32 %v248, %v249
        %v251 = vrot.slane %v250, 2
        %v252 = vadd.s32 %v250, %v251
        %v253 = vrot.slane %v252, 1
        %v254 = vadd.s32 %v252, %v253
        %v255 = vsel %vm226, %v247, 0
        %v256 = vrot.slane %v255, 4
        %v257 = vadd.s32 %v255, %v256
        %v258 = vrot.slane %v257, 2
        %v259 = vadd.s32 %v257, %v258
        %v260 = vrot.slane %v259, 1
        %v261 = vadd.s32 %v259, %v260
        %vm262 = vcmp.eq.f32.partialorder %v207, %v243
        %vm263 = vcmp.lt.s32.totalorder %v210, %v214
        %vm264 = vcmp.lt.s32.totalorder %v210, %v218
        %v265 = vsel %vm263, 1, 0
        %v266 = vsel %vm264, 1, 0
        %v267 = vcombine.low %v265, %v266
        %vm268 = vcmp.ne.s32.totalorder %v267, 0
        %vm269 = vmand %vm262, %vm268
        %v270 = vsel %vm269, 1, 0
        %v271 = vcombine.high %v270, %v270
        %v272 = vsel %vm226, %v270, 0
        %v273 = vrot.slane %v272, 4
        %v274 = vadd.s32 %v272, %v273
        %v275 = vrot.slane %v274, 2
        %v276 = vadd.s32 %v274, %v275
        %v277 = vrot.slane %v276, 1
        %v278 = vadd.s32 %v276, %v277
        %v279 = vsel %vm226, %v271, 0
        %v280 = vrot.slane %v279, 4
        %v281 = vadd.s32 %v279, %v280
        %v282 = vrot.slane %v281, 2
        %v283 = vadd.s32 %v281, %v282
        %v284 = vrot.slane %v283, 1
        %v285 = vadd.s32 %v283, %v284
        %v286 = vadd.s32 %v254, %v278
        %v287 = vadd.s32 %v261, %v285
        %v288 = vlaneseq
        %v289 = vand.u32 %v288, 127
        %v290 = vadd.s32 %v289, 128
        %s291 = smul.u32 %s19, 256
        %v292 = vstv %s291
        %v293 = vadd.s32 %v292, %v289
        %v294 = vadd.s32 %v292, %v290
        %vm295 = vcmp.lt.s32.totalorder %v293, 256
        %vm296 = vcmp.lt.s32.totalorder %v294, 256
        %vm297 = vcmp.lt.s32.totalorder %v286, 1
        %vm298 = vcmp.lt.s32.totalorder %v287, 1
        %vm299 = vmand %vm297, %vm295
        %vm300 = vmand %vm298, %vm296
        %v301 = vld [vmem:[#allocation2] sm:$0x3]
        %v302 = vsel %vm299, 1, 0
        %v303 = vsel %vm300, 1, 0
        %v304 = vcombine.low %v302, %v303
        %v306 = vunpack.c.l.s4 1966171168
        %v307 = vunpack.c.0.s8 %v306
        %v308 = vlaneseq
        %v309 = vshrl.u32 %v308, 7
        %v310 = vsub.s32 %v307, %v309
        %v311 = vrot.slane %v304, %v310
        %v313 = vunpack.c.l.s4 1966171168
        %v314 = vunpack.c.0.s8 %v313
        %v315 = vlaneseq
        %v316 = vshrl.u32 %v315, 7
        %v317 = vsub.s32 %v314, %v316
        %v318 = vrot.slane %v311, %v317
        %v319 = vadd.s32 %v301, %v318
        %v320 = vlaneseq
        %vm321 = vcmp.ge.s32.totalorder %v320, 0
        %vm322 = vcmp.lt.s32.totalorder %v320, 256
        %vm323 = vmand %vm321, %vm322
        %324 = vst.msk [vmem:[#allocation2] sm:$0x3] %vm323, %v319
        // Predicated region
        $region33: #{accuracy_pallas.1} parent=27 // pred_check
          _
        $region34: #{accuracy_pallas.1} parent=27 // pred_check_branch
          %326 = sbr.rel (%p196) target = $region36
        $region35: #{accuracy_pallas.1} parent=27 // pred_region
          %v327 = vld [vmem:[#allocation2] sm:$0x3]
          %v328 = vlaneseq
          %v329 = vshrl.u32 %v328, 7
          %v330 = vsub.s32 0, %v329
          %v331 = vrot.slane %v327, %v330
          %v332 = vlaneseq
          %v333 = vshrl.u32 %v332, 7
          %v334 = vsub.s32 1, %v333
          %v335 = vrot.slane %v327, %v334
          %vm336 = vcmask 1040384
          %v337 = vsel %vm336, %v331, 0
          %v338 = vsel %vm336, %v335, 0
          %v339 = vadd.s32 %v337, %v338
          %v340 = vand.u32 %v339, 65535
          %v341 = vshrl.u32 %v339, 16
          %v342 = vcvt.s32.f32 %v340
          %v343 = vcvt.s32.f32 %v341
          %344 = vadd.xlane.f32.xlu0 %v342
          %v345 = vpop.xlane.xlu0 %344
          %346 = vadd.xlane.f32.xlu0 %v343
          %v347 = vpop.xlane.xlu0 %346
          %v348 = vcvt.f32.s32 %v345
          %v349 = vcvt.f32.s32 %v347
          %v350 = vshll.u32 %v349, 16
          %v351 = vadd.s32 %v350, %v348
          %v352 = vrot.slane %v351, 4
          %v353 = vadd.s32 %v351, %v352
          %v354 = vrot.slane %v353, 2
          %v355 = vadd.s32 %v353, %v354
          %v356 = vrot.slane %v355, 1
          %v357 = vadd.s32 %v355, %v356
          %s358 = vtos %v357
          %s359 = scalar_lea.smem [#allocation3], 0
          %360 = sst [smem:[%s359]] %s358
        $region36: #{accuracy_pallas.1} parent=27 // pred_fallthru
          _
        // Predicated region
        $region37: #{accuracy_pallas.1} parent=27 // pred_check
          %p361 = pneg %p95
        $region38: #{accuracy_pallas.1} parent=27 // pred_check_branch
          %363 = sbr.rel (%p361) target = $region40
        $region39: #{accuracy_pallas.1} parent=27 // pred_region
          %s365 = ssub.s32 16, 16
          %366 = vsyncadd [#allocation4], %s365
          %369 = dma.smem_to_hbm [#allocation3], 16, %s2, [#allocation4]
        $region40: #{accuracy_pallas.1} parent=27 // pred_fallthru
          _
        // Predicated region
        $region41: #{accuracy_pallas.1} parent=27 // pred_check
          %p370 = pneg %p95
        $region42: #{accuracy_pallas.1} parent=27 // pred_check_branch
          %372 = sbr.rel (%p370) target = $region44
        $region43: #{accuracy_pallas.1} parent=27 // pred_region
          %373 = dma.done [#allocation4], 16
        $region44: #{accuracy_pallas.1} parent=27 // pred_fallthru
          _
        %374 = sfence
      $region28: #{accuracy_pallas.1} parent=5 // pred_fallthru
        _
      %p375 = scmp.le.s32.totalorder 2, %s9
      // Predicated region
      $region45: #{accuracy_pallas.1} parent=5 // pred_check
        %p376 = pneg %p375
      $region46: #{accuracy_pallas.1} parent=5 // pred_check_branch
        %378 = sbr.rel (%p376) target = $region48
      $region47: #{accuracy_pallas.1} parent=5 // pred_region
        %s379 = ssub.s32 %s9, 2
      $region48: #{accuracy_pallas.1} parent=5 // pred_fallthru
        _
    $region6: #{accuracy_pallas.1} parent=1 // loop_footer
      %s13 = sadd.s32 1, %s9
    $region7: #{accuracy_pallas.1} parent=1 // loop_footer_branch
      %8 = sbr.rel target = $region3
    $region8: #{accuracy_pallas.1} parent=1 // loop_exit
      _
    %380 = vsyncpa [#allocation4], 1
    %s381 = scalar_lea.sflag [#allocation4], 1
    %382 = vsyncpa %s381, 1

</llo_original>
